<compile_context>
chip_gen: v7x
topology: tpu7x:2x2x1
jax: 0.10.0
libtpu: 0.0.40
codegen_flags: <defaults>
</compile_context>

<pallas_src>
import functools

import jax
import jax.numpy as jnp
import numpy as np
from jax.experimental import pallas as pl
from jax.experimental.pallas import tpu as pltpu

D_HIDN = 128
N_HEAD = 2
D_HEAD = 64


def _mha_kernel(*refs, n_head, d_head, block_b, seq_len, same_qkv, with_prob):
    """One grid step: block_b batch elements x full sequence.

    refs (inputs then outputs):
      [x]  or  [xq, xk, xv]   (block_b*S, d_hidn) bf16 activations
      bias                    (block_b, S, S) f32 additive mask (0 / -1e9)
      w_qkv                   (d_hidn, 3*n_head*d_head) bf16 (scale in Q part)
      b_qkv                   (1, 3*n_head*d_head) f32
      w_o                     (n_head, d_head, d_hidn) bf16
      b_o                     (1, d_hidn) f32
      out                     (block_b*S, d_hidn) f32
      prob (optional)         (block_b, n_head, S, S)
    """
    idx = 0
    if same_qkv:
        xq_ref = xk_ref = xv_ref = refs[idx]
        idx += 1
    else:
        xq_ref, xk_ref, xv_ref = refs[idx:idx + 3]
        idx += 3
    bias_ref, wqkv_ref, bqkv_ref, wo_ref, bo_ref = refs[idx:idx + 5]
    idx += 5
    out_ref = refs[idx]
    idx += 1
    prob_ref = refs[idx] if with_prob else None

    S = seq_len
    HD = n_head * d_head
    bf16 = jnp.bfloat16
    f32 = jnp.float32

    w = wqkv_ref[...]
    b = bqkv_ref[...]
    if same_qkv:
        # Single fused (bs,128)@(128,384) MXU matmul; the q/k/v splits below
        # are 128-aligned lane slices (free).
        qkv = (jnp.dot(xq_ref[...], w, preferred_element_type=f32) + b).astype(bf16)
        q_all = qkv[:, 0:HD]
        k_all = qkv[:, HD:2 * HD]
        v_all = qkv[:, 2 * HD:3 * HD]
    else:
        q_all = (jnp.dot(xq_ref[...], w[:, 0:HD],
                         preferred_element_type=f32) + b[:, 0:HD]).astype(bf16)
        k_all = (jnp.dot(xk_ref[...], w[:, HD:2 * HD],
                         preferred_element_type=f32) + b[:, HD:2 * HD]).astype(bf16)
        v_all = (jnp.dot(xv_ref[...], w[:, 2 * HD:3 * HD],
                         preferred_element_type=f32) + b[:, 2 * HD:3 * HD]).astype(bf16)

    # (bs, HD) -> (block_b, S, HD): scores / context become single batched
    # dot_generals (bounded live ranges; no per-batch Python unroll).
    q_b = q_all.reshape(block_b, S, HD)
    k_b = k_all.reshape(block_b, S, HD)
    v_b = v_all.reshape(block_b, S, HD)

    bias = bias_ref[...]                                   # (block_b, S, S) f32

    acc = None
    for h in range(n_head):                                # n_head is tiny
        sl = slice(h * d_head, (h + 1) * d_head)
        qh = q_b[:, :, sl]                                 # (block_b, S, d_head) bf16
        kh = k_b[:, :, sl]
        vh = v_b[:, :, sl]

        # (block_b, S, S) f32 scores; masking is a single vadd.
        scores = jnp.einsum("bqd,bkd->bqk", qh, kh,
                            preferred_element_type=f32) + bias

        # Softmax in f32; EUP approx reciprocal for the denominator.
        m = jnp.max(scores, axis=-1, keepdims=True)
        e = jnp.exp(scores - m)
        s = jnp.sum(e, axis=-1, keepdims=True)
        prob = e * pl.reciprocal(s, approx=True)

        if with_prob:
            prob_ref[:, h, :, :] = prob.astype(prob_ref.dtype)

        ctx = jnp.einsum("bqk,bkd->bqd", prob.astype(bf16), vh,
                         preferred_element_type=f32)       # (block_b, S, d_head)
        contrib = jnp.dot(ctx.reshape(block_b * S, d_head).astype(bf16),
                          wo_ref[h], preferred_element_type=f32)
        acc = contrib if acc is None else acc + contrib

    out_ref[...] = (acc + bo_ref[...]).astype(out_ref.dtype)


def multi_head_attention(Q, K, V, attn_mask, params, *, n_head=N_HEAD,
                         d_head=D_HEAD, block_b=None, with_prob=True,
                         prob_dtype=jnp.bfloat16):
    """Pallas MultiHeadAttention forward.

    Q, K, V:   (B, S, d_hidn) float32
    attn_mask: (B, S, S) bool (True = masked)
    returns:   output (B, S, d_hidn) f32, and attn_prob (B, n_head, S, S) in
               prob_dtype if with_prob (matching the PyTorch module's forward;
               pass prob_dtype=jnp.float32 for exact dtype parity).
    """
    B, S, d_hidn = Q.shape
    HD = n_head * d_head
    bf16 = jnp.bfloat16
    f32 = jnp.float32

    same_qkv = (Q is K) and (K is V)

    wq, bq, wk, bk, wv, bv, wo, bo = params
    scale = 1.0 / (d_head ** 0.5)
    # Fold the 1/sqrt(d_head) scale into the Q projection; stack [Wq|Wk|Wv]
    # into one fused (d_hidn, 3*HD) bf16 weight (full-width MXU matmuls).
    w_qkv = jnp.concatenate([wq * scale, wk, wv], axis=1).astype(bf16)
    b_qkv = jnp.concatenate([bq * scale, bk, bv]).reshape(1, 3 * HD).astype(f32)
    wo_h = wo.reshape(n_head, d_head, d_hidn).astype(bf16)
    bo_2 = bo.reshape(1, d_hidn).astype(f32)

    # Additive mask bias (0 where visible, -1e9 where masked).
    # Note: for a fully-masked row this yields softmax(scores) rather than the
    # degenerate uniform 1/S of masked_fill_; no such rows occur with a valid
    # pad+causal mask (position 0 is never padding).
    mask_bias = attn_mask.astype(f32) * jnp.float32(-1.0e9)        # (B, S, S)

    # Activations: fold (B, S) -> rows, cast to bf16 (halves HBM traffic).
    q2 = Q.reshape(B * S, d_hidn).astype(bf16)
    if same_qkv:
        acts = [q2]                       # self-attention fast path: ship once
    else:
        acts = [q2,
                K.reshape(B * S, d_hidn).astype(bf16),
                V.reshape(B * S, d_hidn).astype(bf16)]
    n_act = len(acts)
    prob_bytes = jnp.dtype(prob_dtype).itemsize

    # ---- per-generation sizing --------------------------------------------
    try:
        kind = jax.devices()[0].device_kind.lower()
    except Exception:
        kind = ""
    is_v7 = "v7" in kind
    is_v5 = "v5" in kind
    physical_vmem = (64 if is_v7 else 128) * 1024 * 1024
    vmem_cap = int(physical_vmem * 0.85)          # headroom for compiler scratch
    default_scoped = (16 if (is_v5 or not kind) else 32) * 1024 * 1024
    target_rows = 256 if is_v7 else 512           # M rows per grid step
    num_cores = 2 if is_v7 else 1

    def est_vmem(bb):
        bs_ = bb * S
        act = n_act * bs_ * d_hidn * 2
        bias_b = bb * S * S * 4
        out_b = bs_ * d_hidn * 4
        prob_b = bb * n_head * S * S * prob_bytes if with_prob else 0
        weights = (d_hidn * 3 * HD * 2 + 3 * HD * 4
                   + n_head * d_head * d_hidn * 2 + d_hidn * 4)
        # In-kernel temporaries: projected qkv (f32 + bf16), per-head f32
        # scores/exp, bf16 prob, f32 ctx + output accumulator.
        tmp = bs_ * 3 * HD * 6 + bb * S * S * 14 + bs_ * d_hidn * 8
        return 2 * (act + bias_b + out_b + prob_b + weights) + tmp

    if block_b is None:
        min_steps = min(B, 2 * num_cores)         # keep >= 2 steps per core
        block_b = 1
        for cand in range(1, B + 1):
            if B % cand:
                continue
            if cand * S > max(target_rows, S):
                continue
            if B // cand < min_steps:
                continue
            if est_vmem(cand) > vmem_cap:
                continue
            block_b = cand
    assert B % block_b == 0, "block_b must divide B"
    bs = block_b * S

    act_spec = pl.BlockSpec((bs, d_hidn), lambda i: (i, 0))
    bias_spec = pl.BlockSpec((block_b, S, S), lambda i: (i, 0, 0))

    def const_spec(shape):
        zeros = (0,) * len(shape)
        return pl.BlockSpec(shape, lambda i, _z=zeros: _z)

    in_specs = [act_spec] * n_act + [
        bias_spec,
        const_spec(w_qkv.shape), const_spec(b_qkv.shape),
        const_spec(wo_h.shape), const_spec(bo_2.shape),
    ]

    out_shapes = [jax.ShapeDtypeStruct((B * S, d_hidn), jnp.float32)]
    out_specs = [pl.BlockSpec((bs, d_hidn), lambda i: (i, 0))]
    if with_prob:
        out_shapes.append(jax.ShapeDtypeStruct((B, n_head, S, S), prob_dtype))
        out_specs.append(pl.BlockSpec((block_b, n_head, S, S),
                                      lambda i: (i, 0, 0, 0)))

    kernel = functools.partial(_mha_kernel, n_head=n_head, d_head=d_head,
                               block_b=block_b, seq_len=S,
                               same_qkv=same_qkv, with_prob=with_prob)

    est = est_vmem(block_b)
    cp_kwargs = dict(dimension_semantics=("parallel",))
    if est > (3 * default_scoped) // 4:
        cp_kwargs["vmem_limit_bytes"] = int(
            min(vmem_cap, max(est * 5 // 4, 16 * 1024 * 1024)))

    results = pl.pallas_call(
        kernel,
        out_shape=tuple(out_shapes),
        grid_spec=pltpu.PrefetchScalarGridSpec(
            num_scalar_prefetch=0,
            grid=(B // block_b,),
            in_specs=in_specs,
            out_specs=tuple(out_specs),
        ),
        compiler_params=pltpu.CompilerParams(**cp_kwargs),
    )(*acts, mask_bias, w_qkv, b_qkv, wo_h, bo_2)

    if not isinstance(results, (tuple, list)):
        results = (results,)
    out = results[0].reshape(B, S, d_hidn)
    if with_prob:
        return out, results[1]
    return out


def _reference_mha(Q, K, V, attn_mask, params, *, n_head=N_HEAD, d_head=D_HEAD):
    """Pure-JAX reference mirroring the kernel's bf16 MXU operand precision
    (including the scale folded into Wq); masking uses masked-fill semantics
    and the softmax uses an exact division."""
    wq, bq, wk, bk, wv, bv, wo, bo = params
    B, S, _ = Q.shape
    bf16 = jnp.bfloat16
    f32 = jnp.float32
    scale = 1.0 / (d_head ** 0.5)

    def proj(x, w, b_):
        y = jnp.dot(x.astype(bf16), w.astype(bf16),
                    preferred_element_type=f32) + b_
        return y.astype(bf16)

    def split(x):
        return x.reshape(B, S, n_head, d_head).transpose(0, 2, 1, 3)

    q_s = split(proj(Q, wq * scale, bq * scale))
    k_s = split(proj(K, wk, bk))
    v_s = split(proj(V, wv, bv))

    scores = jnp.einsum("bhqd,bhkd->bhqk", q_s, k_s, preferred_element_type=f32)
    scores = jnp.where(attn_mask[:, None, :, :], jnp.float32(-1e9), scores)
    prob = jax.nn.softmax(scores, axis=-1)
    ctx = jnp.einsum("bhqk,bhkd->bhqd", prob.astype(bf16), v_s,
                     preferred_element_type=f32)
    ctx = ctx.transpose(0, 2, 1, 3).reshape(B, S, n_head * d_head)
    out = jnp.dot(ctx.astype(bf16), wo.astype(bf16),
                  preferred_element_type=f32) + bo
    return out, prob


def _get_attn_decoder_mask(seq_ids):
    """Strict upper-triangular causal mask, like get_attn_decoder_mask."""
    B, S = seq_ids.shape
    tri = jnp.triu(jnp.ones((S, S), dtype=jnp.int32), k=1)
    return jnp.broadcast_to(tri[None], (B, S, S))


if __name__ == "__main__":
    B, S = 2, 8
    key = jax.random.PRNGKey(0)
    k_in, k_wq, k_wk, k_wv, k_wo, k_b = jax.random.split(key, 6)

    # Synthetic token ids with trailing padding (0 = pad).
    tokens = jnp.asarray(
        np.array([[5, 9, 3, 7, 2, 0, 0, 0],
                  [4, 1, 8, 6, 3, 2, 9, 0]], dtype=np.int32))

    # Synthetic "input_sums" (embedding + positional) features.
    x = jax.random.normal(k_in, (B, S, D_HIDN), dtype=jnp.float32)
    Q = K = V = x

    # attn_mask = pad mask | subsequent (causal) mask.
    pad_mask = (tokens == 0)[:, None, :]
    pad_mask = jnp.broadcast_to(pad_mask, (B, S, S)).astype(jnp.int32)
    dec_mask = _get_attn_decoder_mask(tokens)
    attn_mask = (pad_mask + dec_mask) > 0

    # Deterministic parameter init (Linear weights stored as [in, out]).
    lim_in = 1.0 / np.sqrt(D_HIDN)
    lim_out = 1.0 / np.sqrt(N_HEAD * D_HEAD)
    wq = jax.random.uniform(k_wq, (D_HIDN, N_HEAD * D_HEAD), jnp.float32, -lim_in, lim_in)
    wk = jax.random.uniform(k_wk, (D_HIDN, N_HEAD * D_HEAD), jnp.float32, -lim_in, lim_in)
    wv = jax.random.uniform(k_wv, (D_HIDN, N_HEAD * D_HEAD), jnp.float32, -lim_in, lim_in)
    wo = jax.random.uniform(k_wo, (N_HEAD * D_HEAD, D_HIDN), jnp.float32, -lim_out, lim_out)
    kb1, kb2, kb3, kb4 = jax.random.split(k_b, 4)
    bq = jax.random.uniform(kb1, (N_HEAD * D_HEAD,), jnp.float32, -lim_in, lim_in)
    bk = jax.random.uniform(kb2, (N_HEAD * D_HEAD,), jnp.float32, -lim_in, lim_in)
    bv = jax.random.uniform(kb3, (N_HEAD * D_HEAD,), jnp.float32, -lim_in, lim_in)
    bo = jax.random.uniform(kb4, (D_HIDN,), jnp.float32, -lim_out, lim_out)
    params = (wq, bq, wk, bk, wv, bv, wo, bo)

    out, prob = multi_head_attention(Q, K, V, attn_mask, params)
    out = jax.block_until_ready(out)
    prob = jax.block_until_ready(prob)

    # Correctness check against the bf16-MXU-mirrored reference.  Kernel
    # additionally uses the EUP approx reciprocal in the softmax and stores
    # attn_prob in bf16, hence the 2e-2 tolerance.
    ref_out, ref_prob = _reference_mha(Q, K, V, attn_mask, params)
    np.testing.assert_allclose(np.asarray(out), np.asarray(ref_out),
                               rtol=2e-2, atol=2e-2)
    np.testing.assert_allclose(np.asarray(jnp.asarray(prob, jnp.float32)),
                               np.asarray(ref_prob), rtol=2e-2, atol=2e-2)

    print("KERNEL_OK")
</pallas_src>

<mosaic_0001>
module attributes {stable_mosaic.version = 11 : i64} {
  func.func @_mha_kernel(%arg0: i32, %arg1: memref<8x128xbf16, #tpu.memory_space<vmem>>, %arg2: memref<1x8x8xf32, #tpu.memory_space<vmem>>, %arg3: memref<128x384xbf16, #tpu.memory_space<vmem>>, %arg4: memref<1x384xf32, #tpu.memory_space<vmem>>, %arg5: memref<2x64x128xbf16, #tpu.memory_space<vmem>>, %arg6: memref<1x128xf32, #tpu.memory_space<vmem>>, %arg7: memref<8x128xf32, #tpu.memory_space<vmem>>, %arg8: memref<1x2x8x8xbf16, #tpu.memory_space<vmem>>) attributes {dimension_semantics = [#tpu.dimension_semantics<parallel>], iteration_bounds = array<i64: 2>, scalar_prefetch = 0 : i64, scratch_operands = 0 : i64, tpu.core_type = #tpu.core_type<tc>, window_params = [{transform_indices = @transform_0, window_bounds = array<i64: 8, 128>}, {transform_indices = @transform_1, window_bounds = array<i64: 1, 8, 8>}, {pipeline_mode = #tpu.pipeline_mode<synchronous>, transform_indices = @transform_2, window_bounds = array<i64: 128, 384>}, {pipeline_mode = #tpu.pipeline_mode<synchronous>, transform_indices = @transform_3, window_bounds = array<i64: 1, 384>}, {pipeline_mode = #tpu.pipeline_mode<synchronous>, transform_indices = @transform_4, window_bounds = array<i64: 2, 64, 128>}, {pipeline_mode = #tpu.pipeline_mode<synchronous>, transform_indices = @transform_5, window_bounds = array<i64: 1, 128>}, {transform_indices = @transform_6, window_bounds = array<i64: 8, 128>}, {transform_indices = @transform_7, window_bounds = array<i64: 1, 2, 8, 8>}]} {
    %c0 = arith.constant 0 : index
    %c0_0 = arith.constant 0 : index
    %0 = vector.load %arg3[%c0, %c0_0] : memref<128x384xbf16, #tpu.memory_space<vmem>>, vector<128x384xbf16>
    %c0_1 = arith.constant 0 : index
    %c0_2 = arith.constant 0 : index
    %1 = vector.load %arg4[%c0_1, %c0_2] : memref<1x384xf32, #tpu.memory_space<vmem>>, vector<1x384xf32>
    %c0_3 = arith.constant 0 : index
    %c0_4 = arith.constant 0 : index
    %2 = vector.load %arg1[%c0_3, %c0_4] : memref<8x128xbf16, #tpu.memory_space<vmem>>, vector<8x128xbf16>
    %cst = arith.constant dense<0.000000e+00> : vector<8x384xf32>
    %3 = tpu.matmul %2, %0, %cst {dimension_numbers = #tpu.dot_dimension_numbers<[1], [0], [0], [1], [0, 0, 1, 1], [], []>} : vector<8x128xbf16>, vector<128x384xbf16>, vector<8x384xf32> -> vector<8x384xf32>
    %4 = vector.broadcast %1 : vector<1x384xf32> to vector<8x384xf32>
    %5 = arith.addf %3, %4 : vector<8x384xf32>
    %6 = arith.truncf %5 : vector<8x384xf32> to vector<8x384xbf16>
    %7 = vector.extract_strided_slice %6 {offsets = [0, 0], sizes = [8, 128], strides = [1, 1]} : vector<8x384xbf16> to vector<8x128xbf16>
    %8 = vector.extract_strided_slice %6 {offsets = [0, 128], sizes = [8, 128], strides = [1, 1]} : vector<8x384xbf16> to vector<8x128xbf16>
    %9 = vector.extract_strided_slice %6 {offsets = [0, 256], sizes = [8, 128], strides = [1, 1]} : vector<8x384xbf16> to vector<8x128xbf16>
    %10 = vector.shape_cast %7 : vector<8x128xbf16> to vector<1x8x128xbf16>
    %11 = vector.shape_cast %8 : vector<8x128xbf16> to vector<1x8x128xbf16>
    %12 = vector.shape_cast %9 : vector<8x128xbf16> to vector<1x8x128xbf16>
    %c0_5 = arith.constant 0 : index
    %c0_6 = arith.constant 0 : index
    %c0_7 = arith.constant 0 : index
    %13 = vector.load %arg2[%c0_5, %c0_6, %c0_7] : memref<1x8x8xf32, #tpu.memory_space<vmem>>, vector<1x8x8xf32>
    %14 = vector.extract_strided_slice %10 {offsets = [0, 0, 0], sizes = [1, 8, 64], strides = [1, 1, 1]} : vector<1x8x128xbf16> to vector<1x8x64xbf16>
    %15 = vector.extract_strided_slice %11 {offsets = [0, 0, 0], sizes = [1, 8, 64], strides = [1, 1, 1]} : vector<1x8x128xbf16> to vector<1x8x64xbf16>
    %16 = vector.extract_strided_slice %12 {offsets = [0, 0, 0], sizes = [1, 8, 64], strides = [1, 1, 1]} : vector<1x8x128xbf16> to vector<1x8x64xbf16>
    "tpu.trace_start"() <{level = 10 : i32, message = "bqd,bkd->bqk"}> : () -> ()
    %cst_8 = arith.constant dense<0.000000e+00> : vector<1x8x8xf32>
    %17 = tpu.matmul %14, %15, %cst_8 {dimension_numbers = #tpu.dot_dimension_numbers<[2], [2], [1], [1], [0, 0, 0, 1, 1, 1], [0], [0]>} : vector<1x8x64xbf16>, vector<1x8x64xbf16>, vector<1x8x8xf32> -> vector<1x8x8xf32>
    "tpu.trace_stop"() : () -> ()
    %18 = arith.addf %17, %13 : vector<1x8x8xf32>
    %cst_9 = arith.constant dense<0xFF800000> : vector<1x8xf32>
    %19 = vector.multi_reduction <maximumf>, %18, %cst_9 [2] : vector<1x8x8xf32> to vector<1x8xf32>
    %20 = vector.shape_cast %19 : vector<1x8xf32> to vector<1x8x1xf32>
    %21 = vector.broadcast %20 : vector<1x8x1xf32> to vector<1x8x8xf32>
    %22 = arith.subf %18, %21 : vector<1x8x8xf32>
    %23 = math.exp %22 : vector<1x8x8xf32>
    %cst_10 = arith.constant dense<0.000000e+00> : vector<1x8xf32>
    %24 = vector.multi_reduction <add>, %23, %cst_10 [2] : vector<1x8x8xf32> to vector<1x8xf32>
    %25 = vector.shape_cast %24 : vector<1x8xf32> to vector<1x8x1xf32>
    %26 = tpu.reciprocal %25 {approx = true} : vector<1x8x1xf32> -> vector<1x8x1xf32>
    %27 = vector.broadcast %26 : vector<1x8x1xf32> to vector<1x8x8xf32>
    %28 = arith.mulf %23, %27 : vector<1x8x8xf32>
    %29 = arith.truncf %28 : vector<1x8x8xf32> to vector<1x8x8xbf16>
    %c0_11 = arith.constant 0 : index
    %c0_12 = arith.constant 0 : index
    %c0_13 = arith.constant 0 : index
    %c0_14 = arith.constant 0 : index
    %30 = vector.load %arg8[%c0_11, %c0_12, %c0_13, %c0_14] : memref<1x2x8x8xbf16, #tpu.memory_space<vmem>>, vector<1x1x8x8xbf16>
    %31 = vector.shape_cast %30 : vector<1x1x8x8xbf16> to vector<1x8x8xbf16>
    %32 = vector.shape_cast %29 : vector<1x8x8xbf16> to vector<1x1x8x8xbf16>
    tpu.vector_store %arg8[%c0_11, %c0_12, %c0_13, %c0_14], %32 {strides = array<i32>} : memref<1x2x8x8xbf16, #tpu.memory_space<vmem>>, vector<1x1x8x8xbf16>,
    %33 = arith.truncf %28 : vector<1x8x8xf32> to vector<1x8x8xbf16>
    "tpu.trace_start"() <{level = 10 : i32, message = "bqk,bkd->bqd"}> : () -> ()
    %cst_15 = arith.constant dense<0.000000e+00> : vector<1x8x64xf32>
    %34 = tpu.matmul %33, %16, %cst_15 {dimension_numbers = #tpu.dot_dimension_numbers<[2], [1], [1], [2], [0, 0, 0, 1, 1, 2], [0], [0]>} : vector<1x8x8xbf16>, vector<1x8x64xbf16>, vector<1x8x64xf32> -> vector<1x8x64xf32>
    "tpu.trace_stop"() : () -> ()
    %35 = vector.shape_cast %34 : vector<1x8x64xf32> to vector<8x64xf32>
    %36 = arith.truncf %35 : vector<8x64xf32> to vector<8x64xbf16>
    %c0_16 = arith.constant 0 : index
    %c0_17 = arith.constant 0 : index
    %c0_18 = arith.constant 0 : index
    %37 = vector.load %arg5[%c0_16, %c0_17, %c0_18] : memref<2x64x128xbf16, #tpu.memory_space<vmem>>, vector<1x64x128xbf16>
    %38 = vector.shape_cast %37 : vector<1x64x128xbf16> to vector<64x128xbf16>
    %cst_19 = arith.constant dense<0.000000e+00> : vector<8x128xf32>
    %39 = tpu.matmul %36, %38, %cst_19 {dimension_numbers = #tpu.dot_dimension_numbers<[1], [0], [0], [1], [0, 0, 1, 1], [], []>} : vector<8x64xbf16>, vector<64x128xbf16>, vector<8x128xf32> -> vector<8x128xf32>
    %40 = vector.extract_strided_slice %10 {offsets = [0, 0, 64], sizes = [1, 8, 64], strides = [1, 1, 1]} : vector<1x8x128xbf16> to vector<1x8x64xbf16>
    %41 = vector.extract_strided_slice %11 {offsets = [0, 0, 64], sizes = [1, 8, 64], strides = [1, 1, 1]} : vector<1x8x128xbf16> to vector<1x8x64xbf16>
    %42 = vector.extract_strided_slice %12 {offsets = [0, 0, 64], sizes = [1, 8, 64], strides = [1, 1, 1]} : vector<1x8x128xbf16> to vector<1x8x64xbf16>
    "tpu.trace_start"() <{level = 10 : i32, message = "bqd,bkd->bqk"}> : () -> ()
    %cst_20 = arith.constant dense<0.000000e+00> : vector<1x8x8xf32>
    %43 = tpu.matmul %40, %41, %cst_20 {dimension_numbers = #tpu.dot_dimension_numbers<[2], [2], [1], [1], [0, 0, 0, 1, 1, 1], [0], [0]>} : vector<1x8x64xbf16>, vector<1x8x64xbf16>, vector<1x8x8xf32> -> vector<1x8x8xf32>
    "tpu.trace_stop"() : () -> ()
    %44 = arith.addf %43, %13 : vector<1x8x8xf32>
    %cst_21 = arith.constant dense<0xFF800000> : vector<1x8xf32>
    %45 = vector.multi_reduction <maximumf>, %44, %cst_21 [2] : vector<1x8x8xf32> to vector<1x8xf32>
    %46 = vector.shape_cast %45 : vector<1x8xf32> to vector<1x8x1xf32>
    %47 = vector.broadcast %46 : vector<1x8x1xf32> to vector<1x8x8xf32>
    %48 = arith.subf %44, %47 : vector<1x8x8xf32>
    %49 = math.exp %48 : vector<1x8x8xf32>
    %cst_22 = arith.constant dense<0.000000e+00> : vector<1x8xf32>
    %50 = vector.multi_reduction <add>, %49, %cst_22 [2] : vector<1x8x8xf32> to vector<1x8xf32>
    %51 = vector.shape_cast %50 : vector<1x8xf32> to vector<1x8x1xf32>
    %52 = tpu.reciprocal %51 {approx = true} : vector<1x8x1xf32> -> vector<1x8x1xf32>
    %53 = vector.broadcast %52 : vector<1x8x1xf32> to vector<1x8x8xf32>
    %54 = arith.mulf %49, %53 : vector<1x8x8xf32>
    %55 = arith.truncf %54 : vector<1x8x8xf32> to vector<1x8x8xbf16>
    %c0_23 = arith.constant 0 : index
    %c1 = arith.constant 1 : index
    %c0_24 = arith.constant 0 : index
    %c0_25 = arith.constant 0 : index
    %56 = vector.load %arg8[%c0_23, %c1, %c0_24, %c0_25] : memref<1x2x8x8xbf16, #tpu.memory_space<vmem>>, vector<1x1x8x8xbf16>
    %57 = vector.shape_cast %56 : vector<1x1x8x8xbf16> to vector<1x8x8xbf16>
    %58 = vector.shape_cast %55 : vector<1x8x8xbf16> to vector<1x1x8x8xbf16>
    tpu.vector_store %arg8[%c0_23, %c1, %c0_24, %c0_25], %58 {strides = array<i32>} : memref<1x2x8x8xbf16, #tpu.memory_space<vmem>>, vector<1x1x8x8xbf16>,
    %59 = arith.truncf %54 : vector<1x8x8xf32> to vector<1x8x8xbf16>
    "tpu.trace_start"() <{level = 10 : i32, message = "bqk,bkd->bqd"}> : () -> ()
    %cst_26 = arith.constant dense<0.000000e+00> : vector<1x8x64xf32>
    %60 = tpu.matmul %59, %42, %cst_26 {dimension_numbers = #tpu.dot_dimension_numbers<[2], [1], [1], [2], [0, 0, 0, 1, 1, 2], [0], [0]>} : vector<1x8x8xbf16>, vector<1x8x64xbf16>, vector<1x8x64xf32> -> vector<1x8x64xf32>
    "tpu.trace_stop"() : () -> ()
    %61 = vector.shape_cast %60 : vector<1x8x64xf32> to vector<8x64xf32>
    %62 = arith.truncf %61 : vector<8x64xf32> to vector<8x64xbf16>
    %c1_27 = arith.constant 1 : index
    %c0_28 = arith.constant 0 : index
    %c0_29 = arith.constant 0 : index
    %63 = vector.load %arg5[%c1_27, %c0_28, %c0_29] : memref<2x64x128xbf16, #tpu.memory_space<vmem>>, vector<1x64x128xbf16>
    %64 = vector.shape_cast %63 : vector<1x64x128xbf16> to vector<64x128xbf16>
    %cst_30 = arith.constant dense<0.000000e+00> : vector<8x128xf32>
    %65 = tpu.matmul %62, %64, %cst_30 {dimension_numbers = #tpu.dot_dimension_numbers<[1], [0], [0], [1], [0, 0, 1, 1], [], []>} : vector<8x64xbf16>, vector<64x128xbf16>, vector<8x128xf32> -> vector<8x128xf32>
    %66 = arith.addf %39, %65 : vector<8x128xf32>
    %c0_31 = arith.constant 0 : index
    %c0_32 = arith.constant 0 : index
    %67 = vector.load %arg6[%c0_31, %c0_32] : memref<1x128xf32, #tpu.memory_space<vmem>>, vector<1x128xf32>
    %68 = vector.broadcast %67 : vector<1x128xf32> to vector<8x128xf32>
    %69 = arith.addf %66, %68 : vector<8x128xf32>
    %c0_33 = arith.constant 0 : index
    %c0_34 = arith.constant 0 : index
    %70 = vector.load %arg7[%c0_33, %c0_34] : memref<8x128xf32, #tpu.memory_space<vmem>>, vector<8x128xf32>
    tpu.vector_store %arg7[%c0_33, %c0_34], %69 {strides = array<i32>} : memref<8x128xf32, #tpu.memory_space<vmem>>, vector<8x128xf32>,
    return
  }
  func.func @transform_0(%arg0: i32) -> (i32, i32) {
    %c0_i32 = arith.constant 0 : i32
    %c0_i32_0 = arith.constant 0 : i32
    return %arg0, %c0_i32 : i32, i32
  }
  func.func @transform_1(%arg0: i32) -> (i32, i32, i32) {
    %c0_i32 = arith.constant 0 : i32
    %c0_i32_0 = arith.constant 0 : i32
    %c0_i32_1 = arith.constant 0 : i32
    return %arg0, %c0_i32, %c0_i32_0 : i32, i32, i32
  }
  func.func @transform_2(%arg0: i32) -> (i32, i32) {
    %c0_i32 = arith.constant 0 : i32
    %c0_i32_0 = arith.constant 0 : i32
    %c0_i32_1 = arith.constant 0 : i32
    return %c0_i32, %c0_i32_0 : i32, i32
  }
  func.func @transform_3(%arg0: i32) -> (i32, i32) {
    %c0_i32 = arith.constant 0 : i32
    %c0_i32_0 = arith.constant 0 : i32
    %c0_i32_1 = arith.constant 0 : i32
    return %c0_i32, %c0_i32_0 : i32, i32
  }
  func.func @transform_4(%arg0: i32) -> (i32, i32, i32) {
    %c0_i32 = arith.constant 0 : i32
    %c0_i32_0 = arith.constant 0 : i32
    %c0_i32_1 = arith.constant 0 : i32
    %c0_i32_2 = arith.constant 0 : i32
    return %c0_i32, %c0_i32_0, %c0_i32_1 : i32, i32, i32
  }
  func.func @transform_5(%arg0: i32) -> (i32, i32) {
    %c0_i32 = arith.constant 0 : i32
    %c0_i32_0 = arith.constant 0 : i32
    %c0_i32_1 = arith.constant 0 : i32
    return %c0_i32, %c0_i32_0 : i32, i32
  }
  func.func @transform_6(%arg0: i32) -> (i32, i32) {
    %c0_i32 = arith.constant 0 : i32
    %c0_i32_0 = arith.constant 0 : i32
    return %arg0, %c0_i32 : i32, i32
  }
  func.func @transform_7(%arg0: i32) -> (i32, i32, i32, i32) {
    %c0_i32 = arith.constant 0 : i32
    %c0_i32_0 = arith.constant 0 : i32
    %c0_i32_1 = arith.constant 0 : i32
    %c0_i32_2 = arith.constant 0 : i32
    return %arg0, %c0_i32, %c0_i32_0, %c0_i32_1 : i32, i32, i32, i32
  }
}

</mosaic_0001>

<llo_original>
// kernel: tpu_custom_call.1
$region0: #{tpu_custom_call.1}
  #allocation0 [shape = 'u32[]', space=smem, size = 0x4, offset = 0x4, fixed_abs, tag = 'smem constant byte address 0x4 - core index']
  #allocation1 [shape = 'u32[144,128]{1,0:T(1,128)}', space=vmem, size = 0x12000, scoped, tag = 'internal scratch']
  %s0 = inlined_call_operand.hbm [shape: bf16[16,128], index: 0, kind: input, shape index: {}]
  %s1 = inlined_call_operand.hbm [shape: f32[2,8,8], index: 1, kind: input, shape index: {}]
  %s2 = inlined_call_operand.hbm [shape: bf16[128,384], index: 2, kind: input, shape index: {}]
  %s3 = inlined_call_operand.vmem [shape: f32[1,384], index: 3, kind: input, shape index: {}]
  %s4 = inlined_call_operand.hbm [shape: bf16[2,64,128], index: 4, kind: input, shape index: {}]
  %s5 = inlined_call_operand.vmem [shape: f32[1,128], index: 5, kind: input, shape index: {}]
  %s6 = inlined_call_operand.hbm [shape: f32[16,128], index: 6, kind: output, shape index: {0}]
  %s7 = inlined_call_operand.hbm [shape: bf16[2,2,8,8], index: 7, kind: output, shape index: {1}]
  %8 = xla_tuple %s6, %s7
  %s9 = sld [smem:[#allocation0]]
  $region81: #{tpu_custom_call.1} parent=0
    _
  %s11 = ssub.s32 1, %s9
  %s12 = scalar_select 0, %s11, %s9
  $region1: #{tpu_custom_call.1} parent=0
    #allocation2 [shape = 'u8[4096]{0}', space=vmem, size = 0x1000, scoped, tag = 'input window, operand 0']
    #allocation3 [shape = 's32[2]{0}', space=sflag, size = 0x8, scoped, tag = 'scoped memory for tpu_custom_call.1']
    #allocation4 [shape = 's32[2]{0}', space=sflag, size = 0x8, scoped, tag = 'scoped memory for tpu_custom_call.1']
    #allocation5 [shape = 'u8[8192]{0}', space=vmem, size = 0x2000, scoped, tag = 'input window, operand 1']
    #allocation6 [shape = 's32[2]{0}', space=sflag, size = 0x8, scoped, tag = 'scoped memory for tpu_custom_call.1']
    #allocation7 [shape = 'u8[98304]{0}', space=vmem, size = 0x18000, scoped, tag = 'input window, operand 2, single buffered']
    #allocation8 [shape = 'u8[32768]{0}', space=vmem, size = 0x8000, scoped, tag = 'input window, operand 4, single buffered']
    #allocation9 [shape = 's32[1]{0}', space=sflag, size = 0x4, scoped, tag = 'scoped memory for tpu_custom_call.1']
    #allocation10 [shape = 'u8[8192]{0}', space=vmem, size = 0x2000, scoped, tag = 'output window, operand 0']
    #allocation11 [shape = 'u8[8192]{0}', space=vmem, size = 0x2000, scoped, tag = 'output window, operand 1']
    #allocation12 [shape = 's32[2]{0}', space=sflag, size = 0x8, scoped, tag = 'scoped memory for tpu_custom_call.1']
    %13 = vsyncpa [#allocation3], 0
    %s14 = scalar_lea.sflag [#allocation3], 1
    %15 = vsyncpa %s14, 0
    %16 = vsyncpa [#allocation6], 0
    %s17 = scalar_lea.sflag [#allocation6], 1
    %18 = vsyncpa %s17, 0
    %19 = vsyncpa [#allocation9], 0
    %20 = vsyncpa [#allocation4], 0
    %s21 = scalar_lea.sflag [#allocation4], 1
    %22 = vsyncpa %s21, 0
    %23 = vsyncpa [#allocation12], 0
    %s24 = scalar_lea.sflag [#allocation12], 1
    %25 = vsyncpa %s24, 0
    loop: start=0, step=1, limit=4
    $region2: #{tpu_custom_call.1} parent=1 // loop_pre_header
      _
    $region3: #{tpu_custom_call.1} parent=1 // loop_header
      %s27 = sphi 0, %s31
      %p28 = scmp.ge.s32.totalorder %s27, 4
      %s37 = sphi 0, %s39
      %s40 = sphi 0, %s37
      %s41 = sphi 0, %s40
      %s57 = sphi 0, %s41
      %s63 = sphi 0, %s65
      %s66 = sphi 0, %s63
      %s67 = sphi 0, %s66
      %s83 = sphi 0, %s67
      %s87 = sphi 0, %s87
      %s89 = sphi 0, %s87
      %s90 = sphi 0, %s89
      %s104 = sphi 0, %s90
      %s108 = sphi 0, %s108
      %s110 = sphi 0, %s108
      %s111 = sphi 0, %s110
      %s125 = sphi 0, %s111
      %s129 = sphi 0, %s129
      %s131 = sphi 0, %s129
      %s132 = sphi 0, %s131
      %s146 = sphi 0, %s132
      %s150 = sphi 0, %s150
      %s152 = sphi 0, %s150
      %s153 = sphi 0, %s152
      %s167 = sphi 0, %s153
      %s173 = sphi 0, %s175
      %s176 = sphi 0, %s173
      %s177 = sphi 0, %s176
      %s193 = sphi 0, %s177
      %s199 = sphi 0, %s201
      %s202 = sphi 0, %s199
      %s203 = sphi 0, %s202
      %s219 = sphi 0, %s203
    $region4: #{tpu_custom_call.1} parent=1 // loop_header_branch
      %30 = sbr.rel (%p28) target = $region8
    $region5: #{tpu_custom_call.1} parent=1 // loop_body
      %s32 = ssub.s32 %s27, 1
      %s33 = ssub.s32 %s27, 2
      %s34 = sadd.s32 %s27, 1
      %s35 = ssub.s32 %s27, %s34
      %p36 = scmp.eq.s32.totalorder %s35, 0
      %s38 = sadd.s32 %s37, 1
      %s39 = scalar_select %p36, %s37, %s38
      %p42 = pneg %p36
      %p43 = scmp.eq.s32.totalorder %s27, 1
      %p44 = por %p42, %p43
      %p45 = scmp.ne.s32.totalorder %s37, %s40
      %p46 = scmp.eq.s32.totalorder %s27, 0
      %p47 = por %p45, %p46
      %p48 = scmp.ne.s32.totalorder %s37, %s40
      %p49 = scmp.eq.s32.totalorder %s32, 1
      %p50 = por %p48, %p49
      %p51 = scmp.ne.s32.totalorder %s40, %s41
      %p52 = scmp.eq.s32.totalorder %s32, 0
      %p53 = por %p51, %p52
      %p54 = scmp.ne.s32.totalorder %s40, %s41
      %p55 = scmp.eq.s32.totalorder %s33, 1
      %p56 = por %p54, %p55
      %p58 = scmp.ne.s32.totalorder %s41, %s57
      %p59 = scmp.eq.s32.totalorder %s33, 0
      %p60 = por %p58, %p59
      %s61 = ssub.s32 %s27, %s34
      %p62 = scmp.eq.s32.totalorder %s61, 0
      %s64 = sadd.s32 %s63, 1
      %s65 = scalar_select %p62, %s63, %s64
      %p68 = pneg %p62
      %p69 = scmp.eq.s32.totalorder %s27, 1
      %p70 = por %p68, %p69
      %p71 = scmp.ne.s32.totalorder %s63, %s66
      %p72 = scmp.eq.s32.totalorder %s27, 0
      %p73 = por %p71, %p72
      %p74 = scmp.ne.s32.totalorder %s63, %s66
      %p75 = scmp.eq.s32.totalorder %s32, 1
      %p76 = por %p74, %p75
      %p77 = scmp.ne.s32.totalorder %s66, %s67
      %p78 = scmp.eq.s32.totalorder %s32, 0
      %p79 = por %p77, %p78
      %p80 = scmp.ne.s32.totalorder %s66, %s67
      %p81 = scmp.eq.s32.totalorder %s33, 1
      %p82 = por %p80, %p81
      %p84 = scmp.ne.s32.totalorder %s67, %s83
      %p85 = scmp.eq.s32.totalorder %s33, 0
      %p86 = por %p84, %p85
      %s88 = sadd.s32 %s87, 1
      %p91 = scmp.eq.s32.totalorder %s27, 1
      %p92 = scmp.ne.s32.totalorder %s87, %s89
      %p93 = scmp.eq.s32.totalorder %s27, 0
      %p94 = por %p92, %p93
      %p95 = scmp.ne.s32.totalorder %s87, %s89
      %p96 = scmp.eq.s32.totalorder %s32, 1
      %p97 = por %p95, %p96
      %p98 = scmp.ne.s32.totalorder %s89, %s90
      %p99 = scmp.eq.s32.totalorder %s32, 0
      %p100 = por %p98, %p99
      %p101 = scmp.ne.s32.totalorder %s89, %s90
      %p102 = scmp.eq.s32.totalorder %s33, 1
      %p103 = por %p101, %p102
      %p105 = scmp.ne.s32.totalorder %s90, %s104
      %p106 = scmp.eq.s32.totalorder %s33, 0
      %p107 = por %p105, %p106
      %s109 = sadd.s32 %s108, 1
      %p112 = scmp.eq.s32.totalorder %s27, 1
      %p113 = scmp.ne.s32.totalorder %s108, %s110
      %p114 = scmp.eq.s32.totalorder %s27, 0
      %p115 = por %p113, %p114
      %p116 = scmp.ne.s32.totalorder %s108, %s110
      %p117 = scmp.eq.s32.totalorder %s32, 1
      %p118 = por %p116, %p117
      %p119 = scmp.ne.s32.totalorder %s110, %s111
      %p120 = scmp.eq.s32.totalorder %s32, 0
      %p121 = por %p119, %p120
      %p122 = scmp.ne.s32.totalorder %s110, %s111
      %p123 = scmp.eq.s32.totalorder %s33, 1
      %p124 = por %p122, %p123
      %p126 = scmp.ne.s32.totalorder %s111, %s125
      %p127 = scmp.eq.s32.totalorder %s33, 0
      %p128 = por %p126, %p127
      %s130 = sadd.s32 %s129, 1
      %p133 = scmp.eq.s32.totalorder %s27, 1
      %p134 = scmp.ne.s32.totalorder %s129, %s131
      %p135 = scmp.eq.s32.totalorder %s27, 0
      %p136 = por %p134, %p135
      %p137 = scmp.ne.s32.totalorder %s129, %s131
      %p138 = scmp.eq.s32.totalorder %s32, 1
      %p139 = por %p137, %p138
      %p140 = scmp.ne.s32.totalorder %s131, %s132
      %p141 = scmp.eq.s32.totalorder %s32, 0
      %p142 = por %p140, %p141
      %p143 = scmp.ne.s32.totalorder %s131, %s132
      %p144 = scmp.eq.s32.totalorder %s33, 1
      %p145 = por %p143, %p144
      %p147 = scmp.ne.s32.totalorder %s132, %s146
      %p148 = scmp.eq.s32.totalorder %s33, 0
      %p149 = por %p147, %p148
      %s151 = sadd.s32 %s150, 1
      %p154 = scmp.eq.s32.totalorder %s27, 1
      %p155 = scmp.ne.s32.totalorder %s150, %s152
      %p156 = scmp.eq.s32.totalorder %s27, 0
      %p157 = por %p155, %p156
      %p158 = scmp.ne.s32.totalorder %s150, %s152
      %p159 = scmp.eq.s32.totalorder %s32, 1
      %p160 = por %p158, %p159
      %p161 = scmp.ne.s32.totalorder %s152, %s153
      %p162 = scmp.eq.s32.totalorder %s32, 0
      %p163 = por %p161, %p162
      %p164 = scmp.ne.s32.totalorder %s152, %s153
      %p165 = scmp.eq.s32.totalorder %s33, 1
      %p166 = por %p164, %p165
      %p168 = scmp.ne.s32.totalorder %s153, %s167
      %p169 = scmp.eq.s32.totalorder %s33, 0
      %p170 = por %p168, %p169
      %s171 = ssub.s32 %s27, %s34
      %p172 = scmp.eq.s32.totalorder %s171, 0
      %s174 = sadd.s32 %s173, 1
      %s175 = scalar_select %p172, %s173, %s174
      %p178 = pneg %p172
      %p179 = scmp.eq.s32.totalorder %s27, 1
      %p180 = por %p178, %p179
      %p181 = scmp.ne.s32.totalorder %s173, %s176
      %p182 = scmp.eq.s32.totalorder %s27, 0
      %p183 = por %p181, %p182
      %p184 = scmp.ne.s32.totalorder %s173, %s176
      %p185 = scmp.eq.s32.totalorder %s32, 1
      %p186 = por %p184, %p185
      %p187 = scmp.ne.s32.totalorder %s176, %s177
      %p188 = scmp.eq.s32.totalorder %s32, 0
      %p189 = por %p187, %p188
      %p190 = scmp.ne.s32.totalorder %s176, %s177
      %p191 = scmp.eq.s32.totalorder %s33, 1
      %p192 = por %p190, %p191
      %p194 = scmp.ne.s32.totalorder %s177, %s193
      %p195 = scmp.eq.s32.totalorder %s33, 0
      %p196 = por %p194, %p195
      %s197 = ssub.s32 %s27, %s34
      %p198 = scmp.eq.s32.totalorder %s197, 0
      %s200 = sadd.s32 %s199, 1
      %s201 = scalar_select %p198, %s199, %s200
      %p204 = pneg %p198
      %p205 = scmp.eq.s32.totalorder %s27, 1
      %p206 = por %p204, %p205
      %p207 = scmp.ne.s32.totalorder %s199, %s202
      %p208 = scmp.eq.s32.totalorder %s27, 0
      %p209 = por %p207, %p208
      %p210 = scmp.ne.s32.totalorder %s199, %s202
      %p211 = scmp.eq.s32.totalorder %s32, 1
      %p212 = por %p210, %p211
      %p213 = scmp.ne.s32.totalorder %s202, %s203
      %p214 = scmp.eq.s32.totalorder %s32, 0
      %p215 = por %p213, %p214
      %p216 = scmp.ne.s32.totalorder %s202, %s203
      %p217 = scmp.eq.s32.totalorder %s33, 1
      %p218 = por %p216, %p217
      %p220 = scmp.ne.s32.totalorder %s203, %s219
      %p221 = scmp.eq.s32.totalorder %s33, 0
      %p222 = por %p220, %p221
      %p223 = scmp.le.s32.totalorder 1, %s27
      %p224 = scmp.lt.s32.totalorder %s27, 3
      %p225 = pnand %p223, %p224
      %p226 = pneg %p225
      // Predicated region
      $region9: #{tpu_custom_call.1} parent=5 // pred_check
        _
      $region10: #{tpu_custom_call.1} parent=5 // pred_check_branch
        %228 = sbr.rel (%p225) target = $region12
      $region11: #{tpu_custom_call.1} parent=5 // pred_region
        %s229 = ssub.s32 %s27, 1
        // Predicated region
        $region13: #{tpu_custom_call.1} parent=11 // pred_check
          %p230 = pneg %p100
        $region14: #{tpu_custom_call.1} parent=11 // pred_check_branch
          %232 = sbr.rel (%p230) target = $region16
        $region15: #{tpu_custom_call.1} parent=11 // pred_region
          %s234 = ssub.s32 3072, 3072
          %235 = vsyncadd [#allocation6], %s234
          %s236 = sshll.u32 [#allocation7], 4
          %s237 = int_to_ptr.vmem [resolvable:$true] %s236
          %242 = dma.hbm_to_vmem [thread:$0]  %s2, 3072, %s237, [#allocation6], 192, 192, 12
        $region16: #{tpu_custom_call.1} parent=11 // pred_fallthru
          _
        // Predicated region
        $region17: #{tpu_custom_call.1} parent=11 // pred_check
          %p243 = pneg %p121
        $region18: #{tpu_custom_call.1} parent=11 // pred_check_branch
          %245 = sbr.rel (%p243) target = $region20
        $region19: #{tpu_custom_call.1} parent=11 // pred_region
          _
        $region20: #{tpu_custom_call.1} parent=11 // pred_fallthru
          _
        // Predicated region
        $region21: #{tpu_custom_call.1} parent=11 // pred_check
          %p246 = pneg %p142
        $region22: #{tpu_custom_call.1} parent=11 // pred_check_branch
          %248 = sbr.rel (%p246) target = $region24
        $region23: #{tpu_custom_call.1} parent=11 // pred_region
          %s250 = ssub.s32 1024, 1024
          %251 = vsyncadd [#allocation9], %s250
          %s252 = sshll.u32 [#allocation8], 4
          %s253 = int_to_ptr.vmem [resolvable:$true] %s252
          %258 = dma.hbm_to_vmem [thread:$0]  %s4, 1024, %s253, [#allocation9], 64, 64, 4
        $region24: #{tpu_custom_call.1} parent=11 // pred_fallthru
          _
        // Predicated region
        $region25: #{tpu_custom_call.1} parent=11 // pred_check
          %p259 = pneg %p163
        $region26: #{tpu_custom_call.1} parent=11 // pred_check_branch
          %261 = sbr.rel (%p259) target = $region28
        $region27: #{tpu_custom_call.1} parent=11 // pred_region
          _
        $region28: #{tpu_custom_call.1} parent=11 // pred_fallthru
          _
      $region12: #{tpu_custom_call.1} parent=5 // pred_fallthru
        _
      %p262 = scmp.lt.s32.totalorder %s27, 2
      // Predicated region
      $region29: #{tpu_custom_call.1} parent=5 // pred_check
        %p263 = pneg %p262
      $region30: #{tpu_custom_call.1} parent=5 // pred_check_branch
        %265 = sbr.rel (%p263) target = $region32
      $region31: #{tpu_custom_call.1} parent=5 // pred_region
        // Predicated region
        $region33: #{tpu_custom_call.1} parent=31 // pred_check
          %p266 = pneg %p47
        $region34: #{tpu_custom_call.1} parent=31 // pred_check_branch
          %268 = sbr.rel (%p266) target = $region36
        $region35: #{tpu_custom_call.1} parent=31 // pred_region
          %s269 = sand.u32 %s37, 1
          %s270 = scalar_lea.sflag [#allocation3], %s269
          %s271 = sand.u32 %s37, 1
          %s272 = smul.addr %s271, 4
          %s273 = scalar_lea.vmem [#allocation2], %s272
          %s275 = ssub.s32 64, 64
          %276 = vsyncadd %s270, %s275
          %s277 = smul.addr %s27, 64
          %s278 = scalar_lea.hbm %s0, %s277
          %s280 = sshll.u32 %s273, 4
          %s281 = int_to_ptr.vmem [resolvable:$true] %s280
          %283 = dma.hbm_to_vmem [thread:$0]  %s278, 64, %s281, %s270
        $region36: #{tpu_custom_call.1} parent=31 // pred_fallthru
          _
        // Predicated region
        $region37: #{tpu_custom_call.1} parent=31 // pred_check
          %p284 = pneg %p73
        $region38: #{tpu_custom_call.1} parent=31 // pred_check_branch
          %286 = sbr.rel (%p284) target = $region40
        $region39: #{tpu_custom_call.1} parent=31 // pred_region
          %s287 = sand.u32 %s27, 1
          %s288 = scalar_lea.sflag [#allocation6], %s287
          %s289 = sand.u32 %s63, 1
          %s290 = smul.addr %s289, 8
          %s291 = scalar_lea.vmem [#allocation5], %s290
          %s293 = ssub.s32 128, 128
          %294 = vsyncadd %s288, %s293
          %s295 = smul.addr %s27, 128
          %s296 = scalar_lea.hbm %s1, %s295
          %s298 = sshll.u32 %s291, 4
          %s299 = int_to_ptr.vmem [resolvable:$true] %s298
          %301 = dma.hbm_to_vmem [thread:$0]  %s296, 128, %s299, %s288
        $region40: #{tpu_custom_call.1} parent=31 // pred_fallthru
          _
      $region32: #{tpu_custom_call.1} parent=5 // pred_fallthru
        _
      %p302 = scmp.le.s32.totalorder 1, %s27
      %p303 = scmp.lt.s32.totalorder %s27, 3
      %p304 = pnand %p302, %p303
      %p305 = pneg %p304
      // Predicated region
      $region41: #{tpu_custom_call.1} parent=5 // pred_check
        _
      $region42: #{tpu_custom_call.1} parent=5 // pred_check_branch
        %307 = sbr.rel (%p304) target = $region44
      $region43: #{tpu_custom_call.1} parent=5 // pred_region
        %s308 = ssub.s32 %s27, 1
        %s309 = sand.u32 %s40, 1
        %s310 = scalar_lea.sflag [#allocation3], %s309
        %s311 = sand.u32 %s40, 1
        %s312 = smul.addr %s311, 4
        %s313 = scalar_lea.vmem [#allocation2], %s312
        // Predicated region
        $region45: #{tpu_custom_call.1} parent=43 // pred_check
          %p314 = pneg %p53
        $region46: #{tpu_custom_call.1} parent=43 // pred_check_branch
          %316 = sbr.rel (%p314) target = $region48
        $region47: #{tpu_custom_call.1} parent=43 // pred_region
          %317 = dma.done %s310, 64
        $region48: #{tpu_custom_call.1} parent=43 // pred_fallthru
          _
        %s318 = sand.u32 %s32, 1
        %s319 = scalar_lea.sflag [#allocation6], %s318
        %s320 = sand.u32 %s66, 1
        %s321 = smul.addr %s320, 8
        %s322 = scalar_lea.vmem [#allocation5], %s321
        // Predicated region
        $region49: #{tpu_custom_call.1} parent=43 // pred_check
          %p323 = pneg %p79
        $region50: #{tpu_custom_call.1} parent=43 // pred_check_branch
          %325 = sbr.rel (%p323) target = $region52
        $region51: #{tpu_custom_call.1} parent=43 // pred_region
          %326 = dma.done %s319, 128
        $region52: #{tpu_custom_call.1} parent=43 // pred_fallthru
          _
        // Predicated region
        $region53: #{tpu_custom_call.1} parent=43 // pred_check
          %p327 = pneg %p100
        $region54: #{tpu_custom_call.1} parent=43 // pred_check_branch
          %329 = sbr.rel (%p327) target = $region56
        $region55: #{tpu_custom_call.1} parent=43 // pred_region
          %330 = dma.done [#allocation6], 3072
        $region56: #{tpu_custom_call.1} parent=43 // pred_fallthru
          _
        // Predicated region
        $region57: #{tpu_custom_call.1} parent=43 // pred_check
          %p331 = pneg %p142
        $region58: #{tpu_custom_call.1} parent=43 // pred_check_branch
          %333 = sbr.rel (%p331) target = $region60
        $region59: #{tpu_custom_call.1} parent=43 // pred_region
          %334 = dma.done [#allocation9], 1024
        $region60: #{tpu_custom_call.1} parent=43 // pred_fallthru
          _
        %s335 = sand.u32 %s40, 1
        %s336 = scalar_lea.sflag [#allocation3], %s335
        %s337 = sand.u32 %s40, 1
        %s338 = smul.addr %s337, 4
        %s339 = scalar_lea.vmem [#allocation2], %s338
        %p340 = pneg %p53
        %p341 = pneg %p50
        %s342 = sand.u32 %s32, 1
        %s343 = scalar_lea.sflag [#allocation6], %s342
        %s344 = sand.u32 %s66, 1
        %s345 = smul.addr %s344, 8
        %s346 = scalar_lea.vmem [#allocation5], %s345
        %p347 = pneg %p79
        %p348 = pneg %p76
        %p349 = pneg %p100
        %p350 = pneg %p97
        %p351 = pneg %p121
        %p352 = pneg %p118
        %p353 = pneg %p142
        %p354 = pneg %p139
        %p355 = pneg %p163
        %p356 = pneg %p160
        %p357 = pneg %p189
        %p358 = pneg %p186
        %s359 = sand.u32 %s176, 1
        %s360 = scalar_lea.sflag [#allocation4], %s359
        %s361 = sand.u32 %s176, 1
        %s362 = smul.addr %s361, 8
        %s363 = scalar_lea.vmem [#allocation10], %s362
        %p364 = pneg %p215
        %p365 = pneg %p212
        %s366 = sand.u32 %s202, 1
        %s367 = scalar_lea.sflag [#allocation12], %s366
        %s368 = sand.u32 %s202, 1
        %s369 = smul.addr %s368, 8
        %s370 = scalar_lea.vmem [#allocation11], %s369
        %v372 = vld [vmem:[#allocation7] sm:$0xff]
        %v373 = vld [vmem:[#allocation7 + $0x8] sm:$0xf]
        %v374 = vld [vmem:[#allocation7 + $0xc] sm:$0xff]
        %v375 = vld [vmem:[#allocation7 + $0x14] sm:$0xf]
        %v376 = vld [vmem:[#allocation7 + $0x18] sm:$0xff]
        %v377 = vld [vmem:[#allocation7 + $0x20] sm:$0xf]
        %v378 = vld [vmem:[#allocation7 + $0x24] sm:$0xff]
        %v379 = vld [vmem:[#allocation7 + $0x2c] sm:$0xf]
        %v380 = vld [vmem:[#allocation7 + $0x30] sm:$0xff]
        %v381 = vld [vmem:[#allocation7 + $0x38] sm:$0xf]
        %v382 = vld [vmem:[#allocation7 + $0x3c] sm:$0xff]
        %v383 = vld [vmem:[#allocation7 + $0x44] sm:$0xf]
        %v384 = vld [vmem:[#allocation7 + $0x48] sm:$0xff]
        %v385 = vld [vmem:[#allocation7 + $0x50] sm:$0xf]
        %v386 = vld [vmem:[#allocation7 + $0x54] sm:$0xff]
        %v387 = vld [vmem:[#allocation7 + $0x5c] sm:$0xf]
        %v388 = vld [vmem:[#allocation7 + $0x60] sm:$0xff]
        %v389 = vld [vmem:[#allocation7 + $0x68] sm:$0xf]
        %v390 = vld [vmem:[#allocation7 + $0x6c] sm:$0xff]
        %v391 = vld [vmem:[#allocation7 + $0x74] sm:$0xf]
        %v392 = vld [vmem:[#allocation7 + $0x78] sm:$0xff]
        %v393 = vld [vmem:[#allocation7 + $0x80] sm:$0xf]
        %v394 = vld [vmem:[#allocation7 + $0x84] sm:$0xff]
        %v395 = vld [vmem:[#allocation7 + $0x8c] sm:$0xf]
        %v396 = vld [vmem:[#allocation7 + $0x90] sm:$0xff]
        %v397 = vld [vmem:[#allocation7 + $0x98] sm:$0xf]
        %v398 = vld [vmem:[#allocation7 + $0x9c] sm:$0xff]
        %v399 = vld [vmem:[#allocation7 + $0xa4] sm:$0xf]
        %v400 = vld [vmem:[#allocation7 + $0xa8] sm:$0xff]
        %v401 = vld [vmem:[#allocation7 + $0xb0] sm:$0xf]
        %v402 = vld [vmem:[#allocation7 + $0xb4] sm:$0xff]
        %v403 = vld [vmem:[#allocation7 + $0xbc] sm:$0xf]
        %v404 = vld [vmem:[%s3] sm:$0x7]
        %v405 = vld [vmem:[%s313] sm:$0xf]
        %v407 = vlaneseq
        %v408 = vshrl.u32 %v407, 7
        %v409 = vsub.s32 0, %v408
        %v410 = vrot.slane %v404, %v409
        %v411 = vlaneseq
        %v412 = vshrl.u32 %v411, 7
        %v413 = vsub.s32 1, %v412
        %v414 = vrot.slane %v404, %v413
        %v415 = vlaneseq
        %v416 = vshrl.u32 %v415, 7
        %v417 = vsub.s32 2, %v416
        %v418 = vrot.slane %v404, %v417
        %v454 = vunpack.c.l.b16 %v372
        %v455 = vunpack.c.h.b16 %v372
        %v456 = vunpack.c.l.b16 %v373
        %v457 = vunpack.c.l.b16 %v374
        %v458 = vunpack.c.h.b16 %v374
        %v459 = vunpack.c.l.b16 %v375
        %v460 = vunpack.c.l.b16 %v376
        %v461 = vunpack.c.h.b16 %v376
        %v462 = vunpack.c.l.b16 %v377
        %v463 = vunpack.c.l.b16 %v378
        %v464 = vunpack.c.h.b16 %v378
        %v465 = vunpack.c.l.b16 %v379
        %v466 = vunpack.c.l.b16 %v380
        %v467 = vunpack.c.h.b16 %v380
        %v468 = vunpack.c.l.b16 %v381
        %v469 = vunpack.c.l.b16 %v382
        %v470 = vunpack.c.h.b16 %v382
        %v471 = vunpack.c.l.b16 %v383
        %v472 = vunpack.c.l.b16 %v384
        %v473 = vunpack.c.h.b16 %v384
        %v474 = vunpack.c.l.b16 %v385
        %v475 = vunpack.c.l.b16 %v386
        %v476 = vunpack.c.h.b16 %v386
        %v477 = vunpack.c.l.b16 %v387
        %v478 = vunpack.c.l.b16 %v388
        %v479 = vunpack.c.h.b16 %v388
        %v480 = vunpack.c.l.b16 %v389
        %v481 = vunpack.c.l.b16 %v390
        %v482 = vunpack.c.h.b16 %v390
        %v483 = vunpack.c.l.b16 %v391
        %v484 = vunpack.c.l.b16 %v392
        %v485 = vunpack.c.h.b16 %v392
        %v486 = vunpack.c.l.b16 %v393
        %v487 = vunpack.c.l.b16 %v394
        %v488 = vunpack.c.h.b16 %v394
        %v489 = vunpack.c.l.b16 %v395
        %v490 = vunpack.c.l.b16 %v396
        %v491 = vunpack.c.h.b16 %v396
        %v492 = vunpack.c.l.b16 %v397
        %v493 = vunpack.c.l.b16 %v398
        %v494 = vunpack.c.h.b16 %v398
        %v495 = vunpack.c.l.b16 %v399
        %v496 = vunpack.c.l.b16 %v400
        %v497 = vunpack.c.h.b16 %v400
        %v498 = vunpack.c.l.b16 %v401
        %v499 = vunpack.c.l.b16 %v402
        %v500 = vunpack.c.h.b16 %v402
        %v501 = vunpack.c.l.b16 %v403
        %v502 = vpack.c.b16 %v457, %v454
        %v503 = vpack.c.b16 %v458, %v455
        %v504 = vpack.c.b16 %v459, %v456
        %v505 = vpack.c.b16 %v463, %v460
        %v506 = vpack.c.b16 %v464, %v461
        %v507 = vpack.c.b16 %v465, %v462
        %v508 = vpack.c.b16 %v469, %v466
        %v509 = vpack.c.b16 %v470, %v467
        %v510 = vpack.c.b16 %v471, %v468
        %v511 = vpack.c.b16 %v475, %v472
        %v512 = vpack.c.b16 %v476, %v473
        %v513 = vpack.c.b16 %v477, %v474
        %v514 = vpack.c.b16 %v481, %v478
        %v515 = vpack.c.b16 %v482, %v479
        %v516 = vpack.c.b16 %v483, %v480
        %v517 = vpack.c.b16 %v487, %v484
        %v518 = vpack.c.b16 %v488, %v485
        %v519 = vpack.c.b16 %v489, %v486
        %v520 = vpack.c.b16 %v493, %v490
        %v521 = vpack.c.b16 %v494, %v491
        %v522 = vpack.c.b16 %v495, %v492
        %v523 = vpack.c.b16 %v499, %v496
        %v524 = vpack.c.b16 %v500, %v497
        %v525 = vpack.c.b16 %v501, %v498
        %550 = vmatprep.subr.bf16.mxu0 %v503
        %551 = vmatpush1.bf16.msra.mxu0 %v502
        %552 = vmatprep.subr.bf16.mxu0 %v506
        %553 = vmatpush1.bf16.msra.mxu0 %v505
        %554 = vmatprep.subr.bf16.mxu0 %v509
        %555 = vmatpush1.bf16.msra.mxu0 %v508
        %556 = vmatprep.subr.bf16.mxu0 %v512
        %557 = vmatpush1.bf16.msra.mxu0 %v511
        %558 = vmatprep.subr.bf16.mxu0 %v515
        %559 = vmatpush1.bf16.msra.mxu0 %v514
        %560 = vmatprep.subr.bf16.mxu0 %v518
        %561 = vmatpush1.bf16.msra.mxu0 %v517
        %562 = vmatprep.subr.bf16.mxu0 %v521
        %563 = vmatpush1.bf16.msra.mxu0 %v520
        %564 = vmatprep.subr.bf16.mxu0 %v524
        %565 = vmatpush1.bf16.msra.mxu0 %v523
        %566 = vmatprep.subr.bf16.mxu0 0
        %567 = vmatpush1.bf16.msra.mxu0 0
        %568 = vmatprep.subr.bf16.mxu0 0
        %569 = vmatpush1.bf16.msra.mxu0 0
        %570 = vmatprep.subr.bf16.mxu0 0
        %571 = vmatpush1.bf16.msra.mxu0 0
        %572 = vmatprep.subr.bf16.mxu0 0
        %573 = vmatpush1.bf16.msra.mxu0 0
        %574 = vmatprep.subr.bf16.mxu0 0
        %575 = vmatpush1.bf16.msra.mxu0 0
        %576 = vmatprep.subr.bf16.mxu0 0
        %577 = vmatpush1.bf16.msra.mxu0 0
        %578 = vmatprep.subr.bf16.mxu0 0
        %579 = vmatpush1.bf16.msra.mxu0 0
        %580 = vmatprep.subr.bf16.mxu0 0
        %581 = vmatpush1.bf16.msra.mxu0 0
        %582 = vmatprep.mubr.bf16.mxu0 0
        %583 = vmatmul.mubr.bf16.gmra.mrb[0].mxu0 %v405
        %v584 = vpop.f32.mrb[0].mxu0
        %v585 = vadd.f32 %v410, %v584
        %v586 = vpop.f32.mrb[0].mxu0
        %v587 = vadd.f32 %v414, %v586
        %v588 = vpop.f32.mrb[0].mxu0
        %v589 = vpop.f32.mrb[0].mxu0
        %590 = vdwg.mxu0
        %591 = vmatprep.subr.bf16.mxu0 0
        %592 = vmatpush1.bf16.msra.mxu0 %v504
        %593 = vmatprep.subr.bf16.mxu0 0
        %594 = vmatpush1.bf16.msra.mxu0 %v507
        %595 = vmatprep.subr.bf16.mxu0 0
        %596 = vmatpush1.bf16.msra.mxu0 %v510
        %597 = vmatprep.subr.bf16.mxu0 0
        %598 = vmatpush1.bf16.msra.mxu0 %v513
        %599 = vmatprep.subr.bf16.mxu0 0
        %600 = vmatpush1.bf16.msra.mxu0 %v516
        %601 = vmatprep.subr.bf16.mxu0 0
        %602 = vmatpush1.bf16.msra.mxu0 %v519
        %603 = vmatprep.subr.bf16.mxu0 0
        %604 = vmatpush1.bf16.msra.mxu0 %v522
        %605 = vmatprep.subr.bf16.mxu0 0
        %606 = vmatpush1.bf16.msra.mxu0 %v525
        %607 = vmatprep.subr.bf16.mxu0 0
        %608 = vmatpush1.bf16.msra.mxu0 0
        %609 = vmatprep.subr.bf16.mxu0 0
        %610 = vmatpush1.bf16.msra.mxu0 0
        %611 = vmatprep.subr.bf16.mxu0 0
        %612 = vmatpush1.bf16.msra.mxu0 0
        %613 = vmatprep.subr.bf16.mxu0 0
        %614 = vmatpush1.bf16.msra.mxu0 0
        %615 = vmatprep.subr.bf16.mxu0 0
        %616 = vmatpush1.bf16.msra.mxu0 0
        %617 = vmatprep.subr.bf16.mxu0 0
        %618 = vmatpush1.bf16.msra.mxu0 0
        %619 = vmatprep.subr.bf16.mxu0 0
        %620 = vmatpush1.bf16.msra.mxu0 0
        %621 = vmatprep.subr.bf16.mxu0 0
        %622 = vmatpush1.bf16.msra.mxu0 0
        %623 = vmatprep.mubr.bf16.mxu0 0
        %624 = vmatmul.mubr.bf16.gmra.mrb[0].mxu0 %v405
        %v625 = vpop.f32.mrb[0].mxu0
        %v626 = vadd.f32 %v418, %v625
        %v627 = vpop.f32.mrb[0].mxu0
        %v628 = vpop.f32.mrb[0].mxu0
        %v629 = vpop.f32.mrb[0].mxu0
        %630 = vdwg.mxu0
        %v631 = vpack.c.bf16 %v585, %v585
        %v632 = vpack.c.bf16 %v587, %v587
        %v633 = vpack.c.bf16 %v626, %v626
        %v634 = vld [vmem:[%s322] sm:$0xff]
        %vm635 = vcmask 523264
        %v637 = vsel %vm635, %v631, 0
        %v640 = vsel %vm635, %v632, 0
        %642 = vmatprep.subr.bf16.mxu0 0
        %643 = vmatpush1.bf16.xpose.msra.mxu0 %v640
        %644 = vmatprep.subr.bf16.mxu0 0
        %645 = vmatpush1.bf16.xpose.msra.mxu0 0
        %646 = vmatprep.subr.bf16.mxu0 0
        %647 = vmatpush1.bf16.xpose.msra.mxu0 0
        %648 = vmatprep.subr.bf16.mxu0 0
        %649 = vmatpush1.bf16.xpose.msra.mxu0 0
        %650 = vmatprep.subr.bf16.mxu0 0
        %651 = vmatpush1.bf16.xpose.msra.mxu0 0
        %652 = vmatprep.subr.bf16.mxu0 0
        %653 = vmatpush1.bf16.xpose.msra.mxu0 0
        %654 = vmatprep.subr.bf16.mxu0 0
        %655 = vmatpush1.bf16.xpose.msra.mxu0 0
        %656 = vmatprep.subr.bf16.mxu0 0
        %657 = vmatpush1.bf16.xpose.msra.mxu0 0
        %658 = vmatprep.subr.bf16.mxu0 0
        %659 = vmatpush1.bf16.xpose.msra.mxu0 0
        %660 = vmatprep.subr.bf16.mxu0 0
        %661 = vmatpush1.bf16.xpose.msra.mxu0 0
        %662 = vmatprep.subr.bf16.mxu0 0
        %663 = vmatpush1.bf16.xpose.msra.mxu0 0
        %664 = vmatprep.subr.bf16.mxu0 0
        %665 = vmatpush1.bf16.xpose.msra.mxu0 0
        %666 = vmatprep.subr.bf16.mxu0 0
        %667 = vmatpush1.bf16.xpose.msra.mxu0 0
        %668 = vmatprep.subr.bf16.mxu0 0
        %669 = vmatpush1.bf16.xpose.msra.mxu0 0
        %670 = vmatprep.subr.bf16.mxu0 0
        %671 = vmatpush1.bf16.xpose.msra.mxu0 0
        %672 = vmatprep.subr.bf16.mxu0 0
        %673 = vmatpush1.bf16.xpose.msra.mxu0 0
        %674 = vmatprep.mubr.bf16.mxu0 0
        %675 = vmatmul.mubr.bf16.gmra.mrb[0].mxu0 %v637
        %v676 = vpop.f32.mrb[0].mxu0
        %v677 = vadd.f32 %v634, %v676
        %v678 = vpop.f32.mrb[0].mxu0
        %v679 = vpop.f32.mrb[0].mxu0
        %v680 = vpop.f32.mrb[0].mxu0
        %681 = vdwg.mxu0
        %vm682 = vcmask 64512
        %v683 = vsel %vm682, %v677, -inf
        %684 = vmax.xlane.f32.xlu0 %v683
        %v685 = vpop.xlane.xlu0 %684
        %v686 = vsub.f32 %v677, %v685
        %v687 = vmul.f32 %v686, 1.442695
        %v688 = vpow.pop %v687
        %v689 = vsel %vm682, %v688, 0.0
        %690 = vadd.xlane.f32.xlu0 %v689
        %v691 = vpop.xlane.xlu0 %690
        %v692 = vrcp.pop %v691
        %v693 = vmul.f32 %v688, %v692
        %v694 = vpack.c.bf16 %v693, %v693
        %vm695 = vcmask 60416
        %696 = vst.msk [vmem:[%s370] sm:$0xf] %vm695, %v694
        %v698 = vsel %vm682, %v694, 0
        %vm700 = vcmask 1043456
        %v702 = vsel %vm700, %v633, 0
        %704 = vmatprep.subr.bf16.mxu0 0
        %705 = vmatpush1.bf16.msra.mxu0 %v702
        %706 = vmatprep.subr.bf16.mxu0 0
        %707 = vmatpush1.bf16.msra.mxu0 0
        %708 = vmatprep.subr.bf16.mxu0 0
        %709 = vmatpush1.bf16.msra.mxu0 0
        %710 = vmatprep.subr.bf16.mxu0 0
        %711 = vmatpush1.bf16.msra.mxu0 0
        %712 = vmatprep.subr.bf16.mxu0 0
        %713 = vmatpush1.bf16.msra.mxu0 0
        %714 = vmatprep.subr.bf16.mxu0 0
        %715 = vmatpush1.bf16.msra.mxu0 0
        %716 = vmatprep.subr.bf16.mxu0 0
        %717 = vmatpush1.bf16.msra.mxu0 0
        %718 = vmatprep.subr.bf16.mxu0 0
        %719 = vmatpush1.bf16.msra.mxu0 0
        %720 = vmatprep.subr.bf16.mxu0 0
        %721 = vmatpush1.bf16.msra.mxu0 0
        %722 = vmatprep.subr.bf16.mxu0 0
        %723 = vmatpush1.bf16.msra.mxu0 0
        %724 = vmatprep.subr.bf16.mxu0 0
        %725 = vmatpush1.bf16.msra.mxu0 0
        %726 = vmatprep.subr.bf16.mxu0 0
        %727 = vmatpush1.bf16.msra.mxu0 0
        %728 = vmatprep.subr.bf16.mxu0 0
        %729 = vmatpush1.bf16.msra.mxu0 0
        %730 = vmatprep.subr.bf16.mxu0 0
        %731 = vmatpush1.bf16.msra.mxu0 0
        %732 = vmatprep.subr.bf16.mxu0 0
        %733 = vmatpush1.bf16.msra.mxu0 0
        %734 = vmatprep.subr.bf16.mxu0 0
        %735 = vmatpush1.bf16.msra.mxu0 0
        %736 = vmatprep.mubr.bf16.mxu0 0
        %737 = vmatmul.mubr.bf16.gmra.mrb[0].mxu0 %v698
        %v738 = vpop.f32.mrb[0].mxu0
        %v739 = vadd.f32 0.0, %v738
        %v740 = vpop.f32.mrb[0].mxu0
        %v741 = vpop.f32.mrb[0].mxu0
        %v742 = vpop.f32.mrb[0].mxu0
        %743 = vdwg.mxu0
        %v744 = vpack.c.bf16 %v739, %v739
        %v745 = vld [vmem:[#allocation8] sm:$0xf]
        %v746 = vld [vmem:[#allocation8 + $0x4] sm:$0xf]
        %v747 = vld [vmem:[#allocation8 + $0x8] sm:$0xf]
        %v748 = vld [vmem:[#allocation8 + $0xc] sm:$0xf]
        %v749 = vld [vmem:[#allocation8 + $0x10] sm:$0xf]
        %v750 = vld [vmem:[#allocation8 + $0x14] sm:$0xf]
        %v751 = vld [vmem:[#allocation8 + $0x18] sm:$0xf]
        %v752 = vld [vmem:[#allocation8 + $0x1c] sm:$0xf]
        %754 = vrot.lane.b32.xlu0 %v631, 64
        %v755 = vpop.permute.xlu0 %754
        %757 = vrot.lane.b32.xlu0 %v632, 64
        %v758 = vpop.permute.xlu0 %757
        %v760 = vsel %vm635, %v755, 0
        %v763 = vsel %vm635, %v758, 0
        %765 = vmatprep.subr.bf16.mxu0 0
        %766 = vmatpush1.bf16.xpose.msra.mxu0 %v763
        %767 = vmatprep.subr.bf16.mxu0 0
        %768 = vmatpush1.bf16.xpose.msra.mxu0 0
        %769 = vmatprep.subr.bf16.mxu0 0
        %770 = vmatpush1.bf16.xpose.msra.mxu0 0
        %771 = vmatprep.subr.bf16.mxu0 0
        %772 = vmatpush1.bf16.xpose.msra.mxu0 0
        %773 = vmatprep.subr.bf16.mxu0 0
        %774 = vmatpush1.bf16.xpose.msra.mxu0 0
        %775 = vmatprep.subr.bf16.mxu0 0
        %776 = vmatpush1.bf16.xpose.msra.mxu0 0
        %777 = vmatprep.subr.bf16.mxu0 0
        %778 = vmatpush1.bf16.xpose.msra.mxu0 0
        %779 = vmatprep.subr.bf16.mxu0 0
        %780 = vmatpush1.bf16.xpose.msra.mxu0 0
        %781 = vmatprep.subr.bf16.mxu0 0
        %782 = vmatpush1.bf16.xpose.msra.mxu0 0
        %783 = vmatprep.subr.bf16.mxu0 0
        %784 = vmatpush1.bf16.xpose.msra.mxu0 0
        %785 = vmatprep.subr.bf16.mxu0 0
        %786 = vmatpush1.bf16.xpose.msra.mxu0 0
        %787 = vmatprep.subr.bf16.mxu0 0
        %788 = vmatpush1.bf16.xpose.msra.mxu0 0
        %789 = vmatprep.subr.bf16.mxu0 0
        %790 = vmatpush1.bf16.xpose.msra.mxu0 0
        %791 = vmatprep.subr.bf16.mxu0 0
        %792 = vmatpush1.bf16.xpose.msra.mxu0 0
        %793 = vmatprep.subr.bf16.mxu0 0
        %794 = vmatpush1.bf16.xpose.msra.mxu0 0
        %795 = vmatprep.subr.bf16.mxu0 0
        %796 = vmatpush1.bf16.xpose.msra.mxu0 0
        %797 = vmatprep.mubr.bf16.mxu0 0
        %798 = vmatmul.mubr.bf16.gmra.mrb[0].mxu0 %v760
        %v799 = vpop.f32.mrb[0].mxu0
        %v800 = vadd.f32 %v634, %v799
        %v801 = vpop.f32.mrb[0].mxu0
        %v802 = vpop.f32.mrb[0].mxu0
        %v803 = vpop.f32.mrb[0].mxu0
        %804 = vdwg.mxu0
        %v805 = vsel %vm682, %v800, -inf
        %806 = vmax.xlane.f32.xlu0 %v805
        %v807 = vpop.xlane.xlu0 %806
        %v808 = vsub.f32 %v800, %v807
        %v809 = vmul.f32 %v808, 1.442695
        %v810 = vpow.pop %v809
        %v811 = vsel %vm682, %v810, 0.0
        %812 = vadd.xlane.f32.xlu0 %v811
        %v813 = vpop.xlane.xlu0 %812
        %v814 = vrcp.pop %v813
        %v815 = vmul.f32 %v810, %v814
        %v816 = vpack.c.bf16 %v815, %v815
        %s817 = scalar_lea.vmem %s370, 4 [#allocation11]
        %818 = vst.msk [vmem:[%s817] sm:$0xf] %vm695, %v816
        %820 = vrot.lane.b32.xlu0 %v633, 64
        %v821 = vpop.permute.xlu0 %820
        %v823 = vsel %vm682, %v816, 0
        %v826 = vsel %vm700, %v821, 0
        %828 = vmatprep.subr.bf16.mxu0 0
        %829 = vmatpush1.bf16.msra.mxu0 %v826
        %830 = vmatprep.subr.bf16.mxu0 0
        %831 = vmatpush1.bf16.msra.mxu0 0
        %832 = vmatprep.subr.bf16.mxu0 0
        %833 = vmatpush1.bf16.msra.mxu0 0
        %834 = vmatprep.subr.bf16.mxu0 0
        %835 = vmatpush1.bf16.msra.mxu0 0
        %836 = vmatprep.subr.bf16.mxu0 0
        %837 = vmatpush1.bf16.msra.mxu0 0
        %838 = vmatprep.subr.bf16.mxu0 0
        %839 = vmatpush1.bf16.msra.mxu0 0
        %840 = vmatprep.subr.bf16.mxu0 0
        %841 = vmatpush1.bf16.msra.mxu0 0
        %842 = vmatprep.subr.bf16.mxu0 0
        %843 = vmatpush1.bf16.msra.mxu0 0
        %844 = vmatprep.subr.bf16.mxu0 0
        %845 = vmatpush1.bf16.msra.mxu0 0
        %846 = vmatprep.subr.bf16.mxu0 0
        %847 = vmatpush1.bf16.msra.mxu0 0
        %848 = vmatprep.subr.bf16.mxu0 0
        %849 = vmatpush1.bf16.msra.mxu0 0
        %850 = vmatprep.subr.bf16.mxu0 0
        %851 = vmatpush1.bf16.msra.mxu0 0
        %852 = vmatprep.subr.bf16.mxu0 0
        %853 = vmatpush1.bf16.msra.mxu0 0
        %854 = vmatprep.subr.bf16.mxu0 0
        %855 = vmatpush1.bf16.msra.mxu0 0
        %856 = vmatprep.subr.bf16.mxu0 0
        %857 = vmatpush1.bf16.msra.mxu0 0
        %858 = vmatprep.subr.bf16.mxu0 0
        %859 = vmatpush1.bf16.msra.mxu0 0
        %860 = vmatprep.mubr.bf16.mxu0 0
        %861 = vmatmul.mubr.bf16.gmra.mrb[0].mxu0 %v823
        %v862 = vpop.f32.mrb[0].mxu0
        %v863 = vadd.f32 0.0, %v862
        %v864 = vpop.f32.mrb[0].mxu0
        %v865 = vpop.f32.mrb[0].mxu0
        %v866 = vpop.f32.mrb[0].mxu0
        %867 = vdwg.mxu0
        %v868 = vpack.c.bf16 %v863, %v863
        %s869 = scalar_lea.vmem [#allocation8], 32
        %v870 = vld [vmem:[%s869] sm:$0xf]
        %v871 = vld [vmem:[%s869 + $0x4] sm:$0xf]
        %v872 = vld [vmem:[%s869 + $0x8] sm:$0xf]
        %v873 = vld [vmem:[%s869 + $0xc] sm:$0xf]
        %v874 = vld [vmem:[%s869 + $0x10] sm:$0xf]
        %v875 = vld [vmem:[%s869 + $0x14] sm:$0xf]
        %v876 = vld [vmem:[%s869 + $0x18] sm:$0xf]
        %v877 = vld [vmem:[%s869 + $0x1c] sm:$0xf]
        %v886 = vunpack.c.l.b16 %v870
        %v887 = vunpack.c.l.b16 %v871
        %v888 = vunpack.c.l.b16 %v872
        %v889 = vunpack.c.l.b16 %v873
        %v890 = vunpack.c.l.b16 %v874
        %v891 = vunpack.c.l.b16 %v875
        %v892 = vunpack.c.l.b16 %v876
        %v893 = vunpack.c.l.b16 %v877
        %v894 = vpack.c.b16 %v887, %v886
        %v895 = vpack.c.b16 %v889, %v888
        %v896 = vpack.c.b16 %v891, %v890
        %v897 = vpack.c.b16 %v893, %v892
        %v903 = vsel %vm635, %v868, 0
        %905 = vmatprep.subr.bf16.mxu0 0
        %906 = vmatpush1.bf16.msra.mxu0 %v894
        %907 = vmatprep.subr.bf16.mxu0 0
        %908 = vmatpush1.bf16.msra.mxu0 %v895
        %909 = vmatprep.subr.bf16.mxu0 0
        %910 = vmatpush1.bf16.msra.mxu0 %v896
        %911 = vmatprep.subr.bf16.mxu0 0
        %912 = vmatpush1.bf16.msra.mxu0 %v897
        %913 = vmatprep.subr.bf16.mxu0 0
        %914 = vmatpush1.bf16.msra.mxu0 0
        %915 = vmatprep.subr.bf16.mxu0 0
        %916 = vmatpush1.bf16.msra.mxu0 0
        %917 = vmatprep.subr.bf16.mxu0 0
        %918 = vmatpush1.bf16.msra.mxu0 0
        %919 = vmatprep.subr.bf16.mxu0 0
        %920 = vmatpush1.bf16.msra.mxu0 0
        %921 = vmatprep.subr.bf16.mxu0 0
        %922 = vmatpush1.bf16.msra.mxu0 0
        %923 = vmatprep.subr.bf16.mxu0 0
        %924 = vmatpush1.bf16.msra.mxu0 0
        %925 = vmatprep.subr.bf16.mxu0 0
        %926 = vmatpush1.bf16.msra.mxu0 0
        %927 = vmatprep.subr.bf16.mxu0 0
        %928 = vmatpush1.bf16.msra.mxu0 0
        %929 = vmatprep.subr.bf16.mxu0 0
        %930 = vmatpush1.bf16.msra.mxu0 0
        %931 = vmatprep.subr.bf16.mxu0 0
        %932 = vmatpush1.bf16.msra.mxu0 0
        %933 = vmatprep.subr.bf16.mxu0 0
        %934 = vmatpush1.bf16.msra.mxu0 0
        %935 = vmatprep.subr.bf16.mxu0 0
        %936 = vmatpush1.bf16.msra.mxu0 0
        %937 = vmatprep.mubr.bf16.mxu0 0
        %938 = vmatmul.mubr.bf16.gmra.mrb[0].mxu0 %v903
        %v939 = vpop.f32.mrb[0].mxu0
        %v940 = vadd.f32 0.0, %v939
        %v941 = vpop.f32.mrb[0].mxu0
        %v942 = vpop.f32.mrb[0].mxu0
        %v943 = vpop.f32.mrb[0].mxu0
        %944 = vdwg.mxu0
        %v953 = vunpack.c.l.b16 %v745
        %v954 = vunpack.c.l.b16 %v746
        %v955 = vunpack.c.l.b16 %v747
        %v956 = vunpack.c.l.b16 %v748
        %v957 = vunpack.c.l.b16 %v749
        %v958 = vunpack.c.l.b16 %v750
        %v959 = vunpack.c.l.b16 %v751
        %v960 = vunpack.c.l.b16 %v752
        %v961 = vpack.c.b16 %v954, %v953
        %v962 = vpack.c.b16 %v956, %v955
        %v963 = vpack.c.b16 %v958, %v957
        %v964 = vpack.c.b16 %v960, %v959
        %v970 = vsel %vm635, %v744, 0
        %972 = vmatprep.subr.bf16.mxu0 0
        %973 = vmatpush1.bf16.msra.mxu0 %v961
        %974 = vmatprep.subr.bf16.mxu0 0
        %975 = vmatpush1.bf16.msra.mxu0 %v962
        %976 = vmatprep.subr.bf16.mxu0 0
        %977 = vmatpush1.bf16.msra.mxu0 %v963
        %978 = vmatprep.subr.bf16.mxu0 0
        %979 = vmatpush1.bf16.msra.mxu0 %v964
        %980 = vmatprep.subr.bf16.mxu0 0
        %981 = vmatpush1.bf16.msra.mxu0 0
        %982 = vmatprep.subr.bf16.mxu0 0
        %983 = vmatpush1.bf16.msra.mxu0 0
        %984 = vmatprep.subr.bf16.mxu0 0
        %985 = vmatpush1.bf16.msra.mxu0 0
        %986 = vmatprep.subr.bf16.mxu0 0
        %987 = vmatpush1.bf16.msra.mxu0 0
        %988 = vmatprep.subr.bf16.mxu0 0
        %989 = vmatpush1.bf16.msra.mxu0 0
        %990 = vmatprep.subr.bf16.mxu0 0
        %991 = vmatpush1.bf16.msra.mxu0 0
        %992 = vmatprep.subr.bf16.mxu0 0
        %993 = vmatpush1.bf16.msra.mxu0 0
        %994 = vmatprep.subr.bf16.mxu0 0
        %995 = vmatpush1.bf16.msra.mxu0 0
        %996 = vmatprep.subr.bf16.mxu0 0
        %997 = vmatpush1.bf16.msra.mxu0 0
        %998 = vmatprep.subr.bf16.mxu0 0
        %999 = vmatpush1.bf16.msra.mxu0 0
        %1000 = vmatprep.subr.bf16.mxu0 0
        %1001 = vmatpush1.bf16.msra.mxu0 0
        %1002 = vmatprep.subr.bf16.mxu0 0
        %1003 = vmatpush1.bf16.msra.mxu0 0
        %1004 = vmatprep.mubr.bf16.mxu0 0
        %1005 = vmatmul.mubr.bf16.gmra.mrb[0].mxu0 %v970
        %v1006 = vpop.f32.mrb[0].mxu0
        %v1007 = vadd.f32 %v940, %v1006
        %v1008 = vpop.f32.mrb[0].mxu0
        %v1009 = vpop.f32.mrb[0].mxu0
        %v1010 = vpop.f32.mrb[0].mxu0
        %1011 = vdwg.mxu0
        %v1012 = vld [vmem:[%s5] sm:$0x1]
        %v1014 = vlaneseq
        %v1015 = vshrl.u32 %v1014, 7
        %v1016 = vsub.s32 0, %v1015
        %v1017 = vrot.slane %v1012, %v1016
        %v1019 = vadd.f32 %v1007, %v1017
        %1020 = vst [vmem:[%s363] sm:$0xff] %v1019
        %s1021 = sand.u32 %s176, 1
        %s1022 = scalar_lea.sflag [#allocation4], %s1021
        %s1023 = sand.u32 %s176, 1
        %s1024 = smul.addr %s1023, 8
        %s1025 = scalar_lea.vmem [#allocation10], %s1024
        %s1026 = sand.u32 %s202, 1
        %s1027 = scalar_lea.sflag [#allocation12], %s1026
        %s1028 = sand.u32 %s202, 1
        %s1029 = smul.addr %s1028, 8
        %s1030 = scalar_lea.vmem [#allocation11], %s1029
        // Predicated region
        $region61: #{tpu_custom_call.1} parent=43 // pred_check
          %p1031 = pneg %p186
        $region62: #{tpu_custom_call.1} parent=43 // pred_check_branch
          %1033 = sbr.rel (%p1031) target = $region64
        $region63: #{tpu_custom_call.1} parent=43 // pred_region
          %s1035 = ssub.s32 128, 128
          %1036 = vsyncadd %s1022, %s1035
          %s1037 = smul.addr %s32, 128
          %s1038 = scalar_lea.hbm %s6, %s1037
          %s1040 = sshll.u32 %s1025, 4
          %s1041 = int_to_ptr.vmem [resolvable:$true] %s1040
          %1043 = dma.vmem_to_hbm [thread:$0]  %s1041, 128, %s1038, %s1022
        $region64: #{tpu_custom_call.1} parent=43 // pred_fallthru
          _
        // Predicated region
        $region65: #{tpu_custom_call.1} parent=43 // pred_check
          %p1044 = pneg %p212
        $region66: #{tpu_custom_call.1} parent=43 // pred_check_branch
          %1046 = sbr.rel (%p1044) target = $region68
        $region67: #{tpu_custom_call.1} parent=43 // pred_region
          %s1048 = ssub.s32 128, 128
          %1049 = vsyncadd %s1027, %s1048
          %s1050 = smul.addr %s32, 2
          %s1051 = smul.addr %s1050, 64
          %s1052 = scalar_lea.hbm %s7, %s1051
          %s1053 = sshll.u32 %s1030, 4
          %s1054 = int_to_ptr.vmem [resolvable:$true] %s1053
          %1059 = dma.vmem_to_hbm [thread:$0]  %s1054, 128, %s1052, %s1027, 64, 64, 4
        $region68: #{tpu_custom_call.1} parent=43 // pred_fallthru
          _
      $region44: #{tpu_custom_call.1} parent=5 // pred_fallthru
        _
      %p1060 = scmp.le.s32.totalorder 2, %s27
      // Predicated region
      $region69: #{tpu_custom_call.1} parent=5 // pred_check
        %p1061 = pneg %p1060
      $region70: #{tpu_custom_call.1} parent=5 // pred_check_branch
        %1063 = sbr.rel (%p1061) target = $region72
      $region71: #{tpu_custom_call.1} parent=5 // pred_region
        %s1064 = ssub.s32 %s27, 2
        // Predicated region
        $region73: #{tpu_custom_call.1} parent=71 // pred_check
          %p1065 = pneg %p192
        $region74: #{tpu_custom_call.1} parent=71 // pred_check_branch
          %1067 = sbr.rel (%p1065) target = $region76
        $region75: #{tpu_custom_call.1} parent=71 // pred_region
          %s1068 = sand.u32 %s177, 1
          %s1069 = scalar_lea.sflag [#allocation4], %s1068
          %s1070 = sand.u32 %s177, 1
          %s1071 = smul.addr %s1070, 8
          %s1072 = scalar_lea.vmem [#allocation10], %s1071
          %1073 = dma.done %s1069, 128
        $region76: #{tpu_custom_call.1} parent=71 // pred_fallthru
          _
        // Predicated region
        $region77: #{tpu_custom_call.1} parent=71 // pred_check
          %p1074 = pneg %p218
        $region78: #{tpu_custom_call.1} parent=71 // pred_check_branch
          %1076 = sbr.rel (%p1074) target = $region80
        $region79: #{tpu_custom_call.1} parent=71 // pred_region
          %s1077 = sand.u32 %s203, 1
          %s1078 = scalar_lea.sflag [#allocation12], %s1077
          %s1079 = sand.u32 %s203, 1
          %s1080 = smul.addr %s1079, 8
          %s1081 = scalar_lea.vmem [#allocation11], %s1080
          %1082 = dma.done %s1078, 128
        $region80: #{tpu_custom_call.1} parent=71 // pred_fallthru
          _
      $region72: #{tpu_custom_call.1} parent=5 // pred_fallthru
        _
    $region6: #{tpu_custom_call.1} parent=1 // loop_footer
      %s31 = sadd.s32 1, %s27
    $region7: #{tpu_custom_call.1} parent=1 // loop_footer_branch
      %26 = sbr.rel target = $region3
    $region8: #{tpu_custom_call.1} parent=1 // loop_exit
      _
    %1083 = vsyncpa [#allocation3], 1
    %s1084 = scalar_lea.sflag [#allocation3], 1
    %1085 = vsyncpa %s1084, 1
    %1086 = vsyncpa [#allocation6], 1
    %s1087 = scalar_lea.sflag [#allocation6], 1
    %1088 = vsyncpa %s1087, 1
    %1089 = vsyncpa [#allocation9], 1
    %1090 = vsyncpa [#allocation4], 1
    %s1091 = scalar_lea.sflag [#allocation4], 1
    %1092 = vsyncpa %s1091, 1
    %1093 = vsyncpa [#allocation12], 1
    %s1094 = scalar_lea.sflag [#allocation12], 1
    %1095 = vsyncpa %s1094, 1

</llo_original>
